<compile_context>
chip_gen: v7x
topology: tpu7x:2x2x1
jax: 0.10.0
libtpu: 0.0.40
codegen_flags: <defaults>
</compile_context>

<pallas_src>
import jax
import jax.numpy as jnp
from jax import lax
from jax.experimental import pallas as pl
from jax.experimental.pallas import tpu as pltpu

# Module hyper-parameters (DistanceWiseRKD.__init__ defaults).
LOSS_WEIGHT = 25.0
WITH_L2_NORM = True
EPS_NORM = 1e-12   # F.normalize eps
EPS_DIST = 1e-12   # euclidean_distance eps
SL1_BETA = 1.0     # F.smooth_l1_loss default beta


def _rkd_kernel(s_ref, t_ref, out_ref, gram_s, gram_t):
    k = pl.program_id(0)

    @pl.when(k == 0)
    def _init():
        gram_s[...] = jnp.zeros_like(gram_s)
        gram_t[...] = jnp.zeros_like(gram_t)

    s = s_ref[...].astype(jnp.float32)          # (N, TILE_D)
    t = t_ref[...].astype(jnp.float32)          # (N, TILE_D)

    # G += X X^T  (contract the feature dim; no explicit transpose needed).
    dn = (((1,), (1,)), ((), ()))
    gram_s[...] += lax.dot_general(s, s, dn, preferred_element_type=jnp.float32)
    gram_t[...] += lax.dot_general(t, t, dn, preferred_element_type=jnp.float32)

    @pl.when(k == pl.num_programs(0) - 1)
    def _finalize():
        n = gram_s.shape[0]
        rows = lax.broadcasted_iota(jnp.int32, (n, n), 0)
        cols = lax.broadcasted_iota(jnp.int32, (n, n), 1)
        eye = rows == cols

        def normalized_distance(g):
            # diag(G) = squared row norms, extracted as both a column and a
            # row vector (avoids an in-kernel transpose).
            diag = jnp.where(eye, g, 0.0)
            sq_col = jnp.sum(diag, axis=1, keepdims=True)   # (N, 1)
            sq_row = jnp.sum(diag, axis=0, keepdims=True)   # (1, N)
            if WITH_L2_NORM:
                # F.normalize: x / max(||x||, eps).  Equivalent on the Gram:
                # G_ij / (n_i n_j); diag -> ||x||^2 / n^2.
                inv_c = 1.0 / jnp.maximum(jnp.sqrt(sq_col), EPS_NORM)
                inv_r = 1.0 / jnp.maximum(jnp.sqrt(sq_row), EPS_NORM)
                g = g * inv_c * inv_r
                sq_col = sq_col * inv_c * inv_c
                sq_row = sq_row * inv_r * inv_r
            d2 = jnp.maximum(sq_col + sq_row - 2.0 * g, EPS_DIST)
            d = jnp.sqrt(d2)
            d = jnp.where(eye, 0.0, d)                       # zero the diagonal
            # mean over strictly-positive entries, then normalize.
            cnt = jnp.sum((d > 0.0).astype(jnp.float32))
            mean_d = jnp.sum(d) / cnt
            return d / mean_d

        d_s = normalized_distance(gram_s[...])
        d_t = normalized_distance(gram_t[...])

        diff = d_s - d_t
        ad = jnp.abs(diff)
        sl1 = jnp.where(ad < SL1_BETA,
                        0.5 * diff * diff / SL1_BETA,
                        ad - 0.5 * SL1_BETA)
        out_ref[0, 0] = LOSS_WEIGHT * jnp.mean(sl1)


def _pick_tile_d(n, d, max_block_bytes=2 << 20):
    """Largest lane-aligned tile (multiple of 128) that divides d and keeps one
    (n, tile_d) f32 block under max_block_bytes; falls back to full width."""
    if d % 128 != 0:
        return d                      # full-width single block is always legal
    max_tile = max(128, (max_block_bytes // (4 * max(n, 1))) // 128 * 128)
    t = min(max_tile, d)
    t = (t // 128) * 128
    while d % t != 0:
        t -= 128
    return t


def distance_wise_rkd(preds_S, preds_T):
    """preds: (N, C, H, W) or (N, D) float32/bf16 -> scalar loss (f32)."""
    n = preds_S.shape[0]
    s = preds_S.reshape(n, -1)
    t = preds_T.reshape(n, -1)
    d = s.shape[1]
    tile_d = _pick_tile_d(n, d)
    grid = (d // tile_d,)

    out = pl.pallas_call(
        _rkd_kernel,
        out_shape=jax.ShapeDtypeStruct((1, 1), jnp.float32),
        grid_spec=pltpu.PrefetchScalarGridSpec(
            num_scalar_prefetch=0,
            grid=grid,
            in_specs=[
                pl.BlockSpec((n, tile_d), lambda k: (0, k)),   # student block
                pl.BlockSpec((n, tile_d), lambda k: (0, k)),   # teacher block
            ],
            out_specs=pl.BlockSpec(memory_space=pltpu.MemorySpace.SMEM),
            scratch_shapes=[
                pltpu.VMEM((n, n), jnp.float32),   # Gram(student)
                pltpu.VMEM((n, n), jnp.float32),   # Gram(teacher)
            ],
        ),
        compiler_params=pltpu.CompilerParams(
            dimension_semantics=("arbitrary",)),   # reduction over feature dim
    )(s, t)
    return out[0, 0]


def distance_wise_rkd_ref(preds_S, preds_T):
    """Pure-JAX reference mirroring the PyTorch forward."""
    n = preds_S.shape[0]
    s = preds_S.reshape(n, -1).astype(jnp.float32)
    t = preds_T.reshape(n, -1).astype(jnp.float32)
    if WITH_L2_NORM:
        s = s / jnp.maximum(jnp.linalg.norm(s, axis=1, keepdims=True), EPS_NORM)
        t = t / jnp.maximum(jnp.linalg.norm(t, axis=1, keepdims=True), EPS_NORM)

    def euclid(p):
        sq = jnp.sum(p * p, axis=-1)
        prod = p @ p.T
        dist = jnp.maximum(sq[:, None] + sq[None, :] - 2.0 * prod, EPS_DIST)
        dist = jnp.sqrt(dist)
        return dist * (1.0 - jnp.eye(p.shape[0], dtype=jnp.float32))

    def norm_by_pos_mean(dm):
        cnt = jnp.sum((dm > 0.0).astype(jnp.float32))
        return dm / (jnp.sum(dm) / cnt)

    d_s = norm_by_pos_mean(euclid(s))
    d_t = norm_by_pos_mean(euclid(t))
    diff = d_s - d_t
    ad = jnp.abs(diff)
    sl1 = jnp.where(ad < SL1_BETA, 0.5 * diff * diff / SL1_BETA,
                    ad - 0.5 * SL1_BETA)
    return LOSS_WEIGHT * jnp.mean(sl1)


if __name__ == "__main__":
    key = jax.random.PRNGKey(0)
    k_s, k_t = jax.random.split(key)

    # Small shapes consistent with the module: (N, C, H, W) -> flattened (N, D).
    N, C, H, W = 8, 4, 16, 16          # D = 1024
    preds_S = jax.random.normal(k_s, (N, C, H, W), dtype=jnp.float32)
    preds_T = jax.random.normal(k_t, (N, C, H, W), dtype=jnp.float32)

    loss = jax.block_until_ready(distance_wise_rkd(preds_S, preds_T))
    ref = jax.block_until_ready(distance_wise_rkd_ref(preds_S, preds_T))
    assert jnp.allclose(loss, ref, rtol=1e-4, atol=1e-5), (loss, ref)

    print("KERNEL_OK")
</pallas_src>

<mosaic_0001>
module attributes {stable_mosaic.version = 11 : i64} {
  func.func @_rkd_kernel(%arg0: i32, %arg1: memref<8x1024xf32, #tpu.memory_space<vmem>>, %arg2: memref<8x1024xf32, #tpu.memory_space<vmem>>, %arg3: memref<1x1xf32, #tpu.memory_space<smem>>, %arg4: memref<8x8xf32, #tpu.memory_space<vmem>>, %arg5: memref<8x8xf32, #tpu.memory_space<vmem>>) attributes {dimension_semantics = [#tpu.dimension_semantics<arbitrary>], iteration_bounds = array<i64: 1>, scalar_prefetch = 0 : i64, scratch_operands = 2 : i64, tpu.core_type = #tpu.core_type<tc>, window_params = [{transform_indices = @transform_0, window_bounds = array<i64: 8, 1024>}, {transform_indices = @transform_1, window_bounds = array<i64: 8, 1024>}, {transform_indices = @transform_2, window_bounds = array<i64: 1, 1>}]} {
    %c0_i32 = arith.constant 0 : i32
    %0 = arith.cmpi eq, %arg0, %c0_i32 : i32
    %1 = arith.extui %0 : i1 to i32
    %c0_i32_0 = arith.constant 0 : i32
    %2 = arith.cmpi ne, %1, %c0_i32_0 : i32
    scf.if %2 {
      %cst_15 = arith.constant 0.000000e+00 : f32
      %16 = vector.broadcast %cst_15 : f32 to vector<8x8xf32>
      %c0_16 = arith.constant 0 : index
      %c0_17 = arith.constant 0 : index
      %17 = vector.load %arg4[%c0_16, %c0_17] : memref<8x8xf32, #tpu.memory_space<vmem>>, vector<8x8xf32>
      tpu.vector_store %arg4[%c0_16, %c0_17], %16 {strides = array<i32>} : memref<8x8xf32, #tpu.memory_space<vmem>>, vector<8x8xf32>,
      %cst_18 = arith.constant 0.000000e+00 : f32
      %18 = vector.broadcast %cst_18 : f32 to vector<8x8xf32>
      %c0_19 = arith.constant 0 : index
      %c0_20 = arith.constant 0 : index
      %19 = vector.load %arg5[%c0_19, %c0_20] : memref<8x8xf32, #tpu.memory_space<vmem>>, vector<8x8xf32>
      tpu.vector_store %arg5[%c0_19, %c0_20], %18 {strides = array<i32>} : memref<8x8xf32, #tpu.memory_space<vmem>>, vector<8x8xf32>,
    } else {
    }
    %c0 = arith.constant 0 : index
    %c0_1 = arith.constant 0 : index
    %3 = vector.load %arg1[%c0, %c0_1] : memref<8x1024xf32, #tpu.memory_space<vmem>>, vector<8x1024xf32>
    %c0_2 = arith.constant 0 : index
    %c0_3 = arith.constant 0 : index
    %4 = vector.load %arg2[%c0_2, %c0_3] : memref<8x1024xf32, #tpu.memory_space<vmem>>, vector<8x1024xf32>
    %c0_4 = arith.constant 0 : index
    %c0_5 = arith.constant 0 : index
    %5 = vector.load %arg4[%c0_4, %c0_5] : memref<8x8xf32, #tpu.memory_space<vmem>>, vector<8x8xf32>
    %cst = arith.constant dense<0.000000e+00> : vector<8x8xf32>
    %6 = tpu.matmul %3, %3, %cst {dimension_numbers = #tpu.dot_dimension_numbers<[1], [1], [0], [0], [0, 0, 1, 0], [], []>} : vector<8x1024xf32>, vector<8x1024xf32>, vector<8x8xf32> -> vector<8x8xf32>
    %7 = arith.addf %5, %6 : vector<8x8xf32>
    %c0_6 = arith.constant 0 : index
    %c0_7 = arith.constant 0 : index
    %8 = vector.load %arg4[%c0_6, %c0_7] : memref<8x8xf32, #tpu.memory_space<vmem>>, vector<8x8xf32>
    tpu.vector_store %arg4[%c0_6, %c0_7], %7 {strides = array<i32>} : memref<8x8xf32, #tpu.memory_space<vmem>>, vector<8x8xf32>,
    %c0_8 = arith.constant 0 : index
    %c0_9 = arith.constant 0 : index
    %9 = vector.load %arg5[%c0_8, %c0_9] : memref<8x8xf32, #tpu.memory_space<vmem>>, vector<8x8xf32>
    %cst_10 = arith.constant dense<0.000000e+00> : vector<8x8xf32>
    %10 = tpu.matmul %4, %4, %cst_10 {dimension_numbers = #tpu.dot_dimension_numbers<[1], [1], [0], [0], [0, 0, 1, 0], [], []>} : vector<8x1024xf32>, vector<8x1024xf32>, vector<8x8xf32> -> vector<8x8xf32>
    %11 = arith.addf %9, %10 : vector<8x8xf32>
    %c0_11 = arith.constant 0 : index
    %c0_12 = arith.constant 0 : index
    %12 = vector.load %arg5[%c0_11, %c0_12] : memref<8x8xf32, #tpu.memory_space<vmem>>, vector<8x8xf32>
    tpu.vector_store %arg5[%c0_11, %c0_12], %11 {strides = array<i32>} : memref<8x8xf32, #tpu.memory_space<vmem>>, vector<8x8xf32>,
    %c0_i32_13 = arith.constant 0 : i32
    %13 = arith.cmpi eq, %arg0, %c0_i32_13 : i32
    %14 = arith.extui %13 : i1 to i32
    %c0_i32_14 = arith.constant 0 : i32
    %15 = arith.cmpi ne, %14, %c0_i32_14 : i32
    scf.if %15 {
      %16 = tpu.iota {dimensions = array<i32: 0>} : vector<8x8xi32>
      %17 = tpu.iota {dimensions = array<i32: 1>} : vector<8x8xi32>
      %18 = arith.cmpi eq, %16, %17 : vector<8x8xi32>
      %c0_15 = arith.constant 0 : index
      %c0_16 = arith.constant 0 : index
      %19 = vector.load %arg4[%c0_15, %c0_16] : memref<8x8xf32, #tpu.memory_space<vmem>>, vector<8x8xf32>
      %cst_17 = arith.constant 0.000000e+00 : f32
      %20 = vector.broadcast %cst_17 : f32 to vector<8x8xf32>
      %21 = arith.select %18, %19, %20 : vector<8x8xi1>, vector<8x8xf32>
      %cst_18 = arith.constant dense<0.000000e+00> : vector<8xf32>
      %22 = vector.multi_reduction <add>, %21, %cst_18 [1] : vector<8x8xf32> to vector<8xf32>
      %23 = vector.shape_cast %22 : vector<8xf32> to vector<8x1xf32>
      %cst_19 = arith.constant dense<0.000000e+00> : vector<8xf32>
      %24 = vector.multi_reduction <add>, %21, %cst_19 [0] : vector<8x8xf32> to vector<8xf32>
      %25 = vector.shape_cast %24 : vector<8xf32> to vector<1x8xf32>
      %26 = math.sqrt %23 : vector<8x1xf32>
      %cst_20 = arith.constant 9.99999996E-13 : f32
      %27 = vector.broadcast %cst_20 : f32 to vector<8x1xf32>
      %28 = arith.maximumf %26, %27 : vector<8x1xf32>
      %cst_21 = arith.constant 1.000000e+00 : f32
      %29 = vector.broadcast %cst_21 : f32 to vector<8x1xf32>
      %30 = arith.divf %29, %28 : vector<8x1xf32>
      %31 = math.sqrt %25 : vector<1x8xf32>
      %cst_22 = arith.constant 9.99999996E-13 : f32
      %32 = vector.broadcast %cst_22 : f32 to vector<1x8xf32>
      %33 = arith.maximumf %31, %32 : vector<1x8xf32>
      %cst_23 = arith.constant 1.000000e+00 : f32
      %34 = vector.broadcast %cst_23 : f32 to vector<1x8xf32>
      %35 = arith.divf %34, %33 : vector<1x8xf32>
      %36 = vector.broadcast %30 : vector<8x1xf32> to vector<8x8xf32>
      %37 = arith.mulf %19, %36 : vector<8x8xf32>
      %38 = vector.broadcast %35 : vector<1x8xf32> to vector<8x8xf32>
      %39 = arith.mulf %37, %38 : vector<8x8xf32>
      %40 = arith.mulf %23, %30 : vector<8x1xf32>
      %41 = arith.mulf %40, %30 : vector<8x1xf32>
      %42 = arith.mulf %25, %35 : vector<1x8xf32>
      %43 = arith.mulf %42, %35 : vector<1x8xf32>
      %44 = vector.broadcast %41 : vector<8x1xf32> to vector<8x8xf32>
      %45 = vector.broadcast %43 : vector<1x8xf32> to vector<8x8xf32>
      %46 = arith.addf %44, %45 : vector<8x8xf32>
      %cst_24 = arith.constant 2.000000e+00 : f32
      %47 = vector.broadcast %cst_24 : f32 to vector<8x8xf32>
      %48 = arith.mulf %47, %39 : vector<8x8xf32>
      %49 = arith.subf %46, %48 : vector<8x8xf32>
      %cst_25 = arith.constant 9.99999996E-13 : f32
      %50 = vector.broadcast %cst_25 : f32 to vector<8x8xf32>
      %51 = arith.maximumf %49, %50 : vector<8x8xf32>
      %52 = math.sqrt %51 : vector<8x8xf32>
      %cst_26 = arith.constant 0.000000e+00 : f32
      %53 = vector.broadcast %cst_26 : f32 to vector<8x8xf32>
      %54 = arith.select %18, %53, %52 : vector<8x8xi1>, vector<8x8xf32>
      %cst_27 = arith.constant 0.000000e+00 : f32
      %55 = vector.broadcast %cst_27 : f32 to vector<8x8xf32>
      %56 = arith.cmpf ogt, %54, %55 : vector<8x8xf32>
      %57 = arith.extui %56 : vector<8x8xi1> to vector<8x8xi32>
      %58 = arith.sitofp %57 : vector<8x8xi32> to vector<8x8xf32>
      %59 = vector.shape_cast %58 : vector<8x8xf32> to vector<1x8x8xf32>
      %cst_28 = arith.constant dense<0.000000e+00> : vector<1xf32>
      %60 = vector.multi_reduction <add>, %59, %cst_28 [1, 2] : vector<1x8x8xf32> to vector<1xf32>
      %61 = vector.shape_cast %60 : vector<1xf32> to vector<1x1x1xf32>
      %62 = vector.extract %61[0, 0, 0] : f32 from vector<1x1x1xf32>
      %63 = vector.shape_cast %54 : vector<8x8xf32> to vector<1x8x8xf32>
      %cst_29 = arith.constant dense<0.000000e+00> : vector<1xf32>
      %64 = vector.multi_reduction <add>, %63, %cst_29 [1, 2] : vector<1x8x8xf32> to vector<1xf32>
      %65 = vector.shape_cast %64 : vector<1xf32> to vector<1x1x1xf32>
      %66 = vector.extract %65[0, 0, 0] : f32 from vector<1x1x1xf32>
      %67 = arith.divf %66, %62 : f32
      %68 = vector.broadcast %67 : f32 to vector<8x8xf32>
      %69 = arith.divf %54, %68 : vector<8x8xf32>
      %c0_30 = arith.constant 0 : index
      %c0_31 = arith.constant 0 : index
      %70 = vector.load %arg5[%c0_30, %c0_31] : memref<8x8xf32, #tpu.memory_space<vmem>>, vector<8x8xf32>
      %cst_32 = arith.constant 0.000000e+00 : f32
      %71 = vector.broadcast %cst_32 : f32 to vector<8x8xf32>
      %72 = arith.select %18, %70, %71 : vector<8x8xi1>, vector<8x8xf32>
      %cst_33 = arith.constant dense<0.000000e+00> : vector<8xf32>
      %73 = vector.multi_reduction <add>, %72, %cst_33 [1] : vector<8x8xf32> to vector<8xf32>
      %74 = vector.shape_cast %73 : vector<8xf32> to vector<8x1xf32>
      %cst_34 = arith.constant dense<0.000000e+00> : vector<8xf32>
      %75 = vector.multi_reduction <add>, %72, %cst_34 [0] : vector<8x8xf32> to vector<8xf32>
      %76 = vector.shape_cast %75 : vector<8xf32> to vector<1x8xf32>
      %77 = math.sqrt %74 : vector<8x1xf32>
      %cst_35 = arith.constant 9.99999996E-13 : f32
      %78 = vector.broadcast %cst_35 : f32 to vector<8x1xf32>
      %79 = arith.maximumf %77, %78 : vector<8x1xf32>
      %cst_36 = arith.constant 1.000000e+00 : f32
      %80 = vector.broadcast %cst_36 : f32 to vector<8x1xf32>
      %81 = arith.divf %80, %79 : vector<8x1xf32>
      %82 = math.sqrt %76 : vector<1x8xf32>
      %cst_37 = arith.constant 9.99999996E-13 : f32
      %83 = vector.broadcast %cst_37 : f32 to vector<1x8xf32>
      %84 = arith.maximumf %82, %83 : vector<1x8xf32>
      %cst_38 = arith.constant 1.000000e+00 : f32
      %85 = vector.broadcast %cst_38 : f32 to vector<1x8xf32>
      %86 = arith.divf %85, %84 : vector<1x8xf32>
      %87 = vector.broadcast %81 : vector<8x1xf32> to vector<8x8xf32>
      %88 = arith.mulf %70, %87 : vector<8x8xf32>
      %89 = vector.broadcast %86 : vector<1x8xf32> to vector<8x8xf32>
      %90 = arith.mulf %88, %89 : vector<8x8xf32>
      %91 = arith.mulf %74, %81 : vector<8x1xf32>
      %92 = arith.mulf %91, %81 : vector<8x1xf32>
      %93 = arith.mulf %76, %86 : vector<1x8xf32>
      %94 = arith.mulf %93, %86 : vector<1x8xf32>
      %95 = vector.broadcast %92 : vector<8x1xf32> to vector<8x8xf32>
      %96 = vector.broadcast %94 : vector<1x8xf32> to vector<8x8xf32>
      %97 = arith.addf %95, %96 : vector<8x8xf32>
      %cst_39 = arith.constant 2.000000e+00 : f32
      %98 = vector.broadcast %cst_39 : f32 to vector<8x8xf32>
      %99 = arith.mulf %98, %90 : vector<8x8xf32>
      %100 = arith.subf %97, %99 : vector<8x8xf32>
      %cst_40 = arith.constant 9.99999996E-13 : f32
      %101 = vector.broadcast %cst_40 : f32 to vector<8x8xf32>
      %102 = arith.maximumf %100, %101 : vector<8x8xf32>
      %103 = math.sqrt %102 : vector<8x8xf32>
      %cst_41 = arith.constant 0.000000e+00 : f32
      %104 = vector.broadcast %cst_41 : f32 to vector<8x8xf32>
      %105 = arith.select %18, %104, %103 : vector<8x8xi1>, vector<8x8xf32>
      %cst_42 = arith.constant 0.000000e+00 : f32
      %106 = vector.broadcast %cst_42 : f32 to vector<8x8xf32>
      %107 = arith.cmpf ogt, %105, %106 : vector<8x8xf32>
      %108 = arith.extui %107 : vector<8x8xi1> to vector<8x8xi32>
      %109 = arith.sitofp %108 : vector<8x8xi32> to vector<8x8xf32>
      %110 = vector.shape_cast %109 : vector<8x8xf32> to vector<1x8x8xf32>
      %cst_43 = arith.constant dense<0.000000e+00> : vector<1xf32>
      %111 = vector.multi_reduction <add>, %110, %cst_43 [1, 2] : vector<1x8x8xf32> to vector<1xf32>
      %112 = vector.shape_cast %111 : vector<1xf32> to vector<1x1x1xf32>
      %113 = vector.extract %112[0, 0, 0] : f32 from vector<1x1x1xf32>
      %114 = vector.shape_cast %105 : vector<8x8xf32> to vector<1x8x8xf32>
      %cst_44 = arith.constant dense<0.000000e+00> : vector<1xf32>
      %115 = vector.multi_reduction <add>, %114, %cst_44 [1, 2] : vector<1x8x8xf32> to vector<1xf32>
      %116 = vector.shape_cast %115 : vector<1xf32> to vector<1x1x1xf32>
      %117 = vector.extract %116[0, 0, 0] : f32 from vector<1x1x1xf32>
      %118 = arith.divf %117, %113 : f32
      %119 = vector.broadcast %118 : f32 to vector<8x8xf32>
      %120 = arith.divf %105, %119 : vector<8x8xf32>
      %121 = arith.subf %69, %120 : vector<8x8xf32>
      %122 = math.absf %121 : vector<8x8xf32>
      %cst_45 = arith.constant 1.000000e+00 : f32
      %123 = vector.broadcast %cst_45 : f32 to vector<8x8xf32>
      %124 = arith.cmpf olt, %122, %123 : vector<8x8xf32>
      %cst_46 = arith.constant 5.000000e-01 : f32
      %125 = vector.broadcast %cst_46 : f32 to vector<8x8xf32>
      %126 = arith.mulf %125, %121 : vector<8x8xf32>
      %127 = arith.mulf %126, %121 : vector<8x8xf32>
      %cst_47 = arith.constant 1.000000e+00 : f32
      %128 = vector.broadcast %cst_47 : f32 to vector<8x8xf32>
      %129 = arith.divf %127, %128 : vector<8x8xf32>
      %cst_48 = arith.constant 5.000000e-01 : f32
      %130 = vector.broadcast %cst_48 : f32 to vector<8x8xf32>
      %131 = arith.subf %122, %130 : vector<8x8xf32>
      %132 = arith.select %124, %129, %131 : vector<8x8xi1>, vector<8x8xf32>
      %133 = vector.shape_cast %132 : vector<8x8xf32> to vector<1x8x8xf32>
      %cst_49 = arith.constant dense<0.000000e+00> : vector<1xf32>
      %134 = vector.multi_reduction <add>, %133, %cst_49 [1, 2] : vector<1x8x8xf32> to vector<1xf32>
      %135 = vector.shape_cast %134 : vector<1xf32> to vector<1x1x1xf32>
      %136 = vector.extract %135[0, 0, 0] : f32 from vector<1x1x1xf32>
      %cst_50 = arith.constant 6.400000e+01 : f32
      %137 = arith.divf %136, %cst_50 : f32
      %cst_51 = arith.constant 2.500000e+01 : f32
      %138 = arith.mulf %cst_51, %137 : f32
      %c0_52 = arith.constant 0 : index
      %c0_53 = arith.constant 0 : index
      %139 = memref.load %arg3[%c0_52, %c0_53] : memref<1x1xf32, #tpu.memory_space<smem>>
      memref.store %138, %arg3[%c0_52, %c0_53] : memref<1x1xf32, #tpu.memory_space<smem>>
    } else {
    }
    return
  }
  func.func @transform_0(%arg0: i32) -> (i32, i32) {
    %c0_i32 = arith.constant 0 : i32
    %c0_i32_0 = arith.constant 0 : i32
    return %c0_i32, %arg0 : i32, i32
  }
  func.func @transform_1(%arg0: i32) -> (i32, i32) {
    %c0_i32 = arith.constant 0 : i32
    %c0_i32_0 = arith.constant 0 : i32
    return %c0_i32, %arg0 : i32, i32
  }
  func.func @transform_2(%arg0: i32) -> (i32, i32) {
    %c0_i32 = arith.constant 0 : i32
    %c0_i32_0 = arith.constant 0 : i32
    %c0_i32_1 = arith.constant 0 : i32
    return %c0_i32, %c0_i32_0 : i32, i32
  }
}

</mosaic_0001>

<llo_original>
// kernel: tpu_custom_call.1
$region0: #{tpu_custom_call.1}
  #allocation0 [shape = 'u32[]', space=smem, size = 0x4, offset = 0x4, fixed_abs, tag = 'smem constant byte address 0x4 - core index']
  #allocation1 [shape = 'u32[144,128]{1,0:T(1,128)}', space=vmem, size = 0x12000, scoped, tag = 'internal scratch']
  #allocation2 [shape = 'f32[8,8]{1,0:T(8,128)}', space=vmem, size = 0x1000, scoped, tag = 'scratch operand']
  #allocation3 [shape = 'f32[8,8]{1,0:T(8,128)}', space=vmem, size = 0x1000, scoped, tag = 'scratch operand']
  %s0 = inlined_call_operand.hbm [shape: f32[8,1024], index: 0, kind: input, shape index: {}]
  %s1 = inlined_call_operand.hbm [shape: f32[8,1024], index: 1, kind: input, shape index: {}]
  %s2 = inlined_call_operand.hbm [shape: f32[1,1], index: 2, kind: output, shape index: {}]
  %s3 = sld [smem:[#allocation0]]
  $region34: #{tpu_custom_call.1} parent=0
    _
  %s5 = ssub.s32 1, %s3
  %s6 = scalar_select 0, %s5, %s3
  $region1: #{tpu_custom_call.1} parent=0
    #allocation4 [shape = 'u8[32768]{0}', space=vmem, size = 0x8000, scoped, tag = 'input window, operand 0, single buffered']
    #allocation5 [shape = 's32[1]{0}', space=sflag, size = 0x4, scoped, tag = 'scoped memory for tpu_custom_call.1']
    #allocation6 [shape = 's32[1]{0}', space=sflag, size = 0x4, scoped, tag = 'scoped memory for tpu_custom_call.1']
    #allocation7 [shape = 'u8[32768]{0}', space=vmem, size = 0x8000, scoped, tag = 'input window, operand 1, single buffered']
    #allocation8 [shape = 's32[1]{0}', space=sflag, size = 0x4, scoped, tag = 'scoped memory for tpu_custom_call.1']
    #allocation9 [shape = 'u8[512]{0}', space=smem, size = 0x200, scoped, tag = 'output window, operand 0, single buffered']
    %7 = vsyncpa [#allocation5], 0
    %8 = vsyncpa [#allocation8], 0
    %9 = vsyncpa [#allocation6], 0
    // Predicated region
    $region2: #{tpu_custom_call.1} parent=1 // pred_check
      _
    $region3: #{tpu_custom_call.1} parent=1 // pred_check_branch
      %11 = sbr.rel (0) target = $region5
    $region4: #{tpu_custom_call.1} parent=1 // pred_region
      %s13 = ssub.s32 1024, 1024
      %14 = vsyncadd [#allocation5], %s13
      %s16 = sshll.u32 [#allocation4], 4
      %s17 = int_to_ptr.vmem [resolvable:$true] %s16
      %19 = dma.hbm_to_vmem [thread:$0]  %s0, 1024, %s17, [#allocation5]
    $region5: #{tpu_custom_call.1} parent=1 // pred_fallthru
      _
    // Predicated region
    $region6: #{tpu_custom_call.1} parent=1 // pred_check
      _
    $region7: #{tpu_custom_call.1} parent=1 // pred_check_branch
      %21 = sbr.rel (0) target = $region9
    $region8: #{tpu_custom_call.1} parent=1 // pred_region
      %s23 = ssub.s32 1024, 1024
      %24 = vsyncadd [#allocation8], %s23
      %s26 = sshll.u32 [#allocation7], 4
      %s27 = int_to_ptr.vmem [resolvable:$true] %s26
      %29 = dma.hbm_to_vmem [thread:$0]  %s1, 1024, %s27, [#allocation8]
    $region9: #{tpu_custom_call.1} parent=1 // pred_fallthru
      _
    // Predicated region
    $region10: #{tpu_custom_call.1} parent=1 // pred_check
      _
    $region11: #{tpu_custom_call.1} parent=1 // pred_check_branch
      %31 = sbr.rel (0) target = $region13
    $region12: #{tpu_custom_call.1} parent=1 // pred_region
      %32 = dma.done [#allocation5], 1024
    $region13: #{tpu_custom_call.1} parent=1 // pred_fallthru
      _
    // Predicated region
    $region14: #{tpu_custom_call.1} parent=1 // pred_check
      _
    $region15: #{tpu_custom_call.1} parent=1 // pred_check_branch
      %34 = sbr.rel (0) target = $region17
    $region16: #{tpu_custom_call.1} parent=1 // pred_region
      %35 = dma.done [#allocation8], 1024
    $region17: #{tpu_custom_call.1} parent=1 // pred_fallthru
      _
    %p36 = scmp.eq.s32.totalorder 0, 0
    // Predicated region
    $region18: #{tpu_custom_call.1} parent=1 // pred_check
      %p37 = pneg %p36
    $region19: #{tpu_custom_call.1} parent=1 // pred_check_branch
      %39 = sbr.rel (%p37) target = $region21
    $region20: #{tpu_custom_call.1} parent=1 // pred_region
      %vm40 = vcmask 64512
      %41 = vst.msk [vmem:[#allocation2] sm:$0xff] %vm40, 0.0
      %42 = vst.msk [vmem:[#allocation3] sm:$0xff] %vm40, 0.0
    $region21: #{tpu_custom_call.1} parent=1 // pred_fallthru
      _
    %v43 = vld [vmem:[#allocation4] sm:$0xff]
    %v44 = vld [vmem:[#allocation4 + $0x8] sm:$0xff]
    %v45 = vld [vmem:[#allocation4 + $0x10] sm:$0xff]
    %v46 = vld [vmem:[#allocation4 + $0x18] sm:$0xff]
    %v47 = vld [vmem:[#allocation4 + $0x20] sm:$0xff]
    %v48 = vld [vmem:[#allocation4 + $0x28] sm:$0xff]
    %v49 = vld [vmem:[#allocation4 + $0x30] sm:$0xff]
    %v50 = vld [vmem:[#allocation4 + $0x38] sm:$0xff]
    %v51 = vld [vmem:[#allocation7] sm:$0xff]
    %v52 = vld [vmem:[#allocation7 + $0x8] sm:$0xff]
    %v53 = vld [vmem:[#allocation7 + $0x10] sm:$0xff]
    %v54 = vld [vmem:[#allocation7 + $0x18] sm:$0xff]
    %v55 = vld [vmem:[#allocation7 + $0x20] sm:$0xff]
    %v56 = vld [vmem:[#allocation7 + $0x28] sm:$0xff]
    %v57 = vld [vmem:[#allocation7 + $0x30] sm:$0xff]
    %v58 = vld [vmem:[#allocation7 + $0x38] sm:$0xff]
    %v59 = vld [vmem:[#allocation2] sm:$0xff]
    %60 = vmatprep.subr.mxu0 %v44
    %61 = vmatpush1.xpose.msra.mxu0 %v43
    %62 = vmatprep.subr.mxu0 0.0
    %63 = vmatpush1.xpose.msra.mxu0 0.0
    %64 = vmatprep.subr.mxu0 0.0
    %65 = vmatpush1.xpose.msra.mxu0 0.0
    %66 = vmatprep.subr.mxu0 0.0
    %67 = vmatpush1.xpose.msra.mxu0 0.0
    %68 = vmatprep.subr.mxu0 0.0
    %69 = vmatpush1.xpose.msra.mxu0 0.0
    %70 = vmatprep.subr.mxu0 0.0
    %71 = vmatpush1.xpose.msra.mxu0 0.0
    %72 = vmatprep.subr.mxu0 0.0
    %73 = vmatpush1.xpose.msra.mxu0 0.0
    %74 = vmatprep.subr.mxu0 0.0
    %75 = vmatpush1.xpose.msra.mxu0 0.0
    %76 = vmatprep.subr.mxu0 0.0
    %77 = vmatpush1.xpose.msra.mxu0 0.0
    %78 = vmatprep.subr.mxu0 0.0
    %79 = vmatpush1.xpose.msra.mxu0 0.0
    %80 = vmatprep.subr.mxu0 0.0
    %81 = vmatpush1.xpose.msra.mxu0 0.0
    %82 = vmatprep.subr.mxu0 0.0
    %83 = vmatpush1.xpose.msra.mxu0 0.0
    %84 = vmatprep.subr.mxu0 0.0
    %85 = vmatpush1.xpose.msra.mxu0 0.0
    %86 = vmatprep.subr.mxu0 0.0
    %87 = vmatpush1.xpose.msra.mxu0 0.0
    %88 = vmatprep.subr.mxu0 0.0
    %89 = vmatpush1.xpose.msra.mxu0 0.0
    %90 = vmatprep.subr.mxu0 0.0
    %91 = vmatpush1.xpose.msra.mxu0 0.0
    %92 = vmatprep.subr.mxu0 0.0
    %93 = vmatpush1.xpose.msra.mxu0 0.0
    %94 = vmatprep.subr.mxu0 0.0
    %95 = vmatpush1.xpose.msra.mxu0 0.0
    %96 = vmatprep.subr.mxu0 0.0
    %97 = vmatpush1.xpose.msra.mxu0 0.0
    %98 = vmatprep.subr.mxu0 0.0
    %99 = vmatpush1.xpose.msra.mxu0 0.0
    %100 = vmatprep.subr.mxu0 0.0
    %101 = vmatpush1.xpose.msra.mxu0 0.0
    %102 = vmatprep.subr.mxu0 0.0
    %103 = vmatpush1.xpose.msra.mxu0 0.0
    %104 = vmatprep.subr.mxu0 0.0
    %105 = vmatpush1.xpose.msra.mxu0 0.0
    %106 = vmatprep.subr.mxu0 0.0
    %107 = vmatpush1.xpose.msra.mxu0 0.0
    %108 = vmatprep.subr.mxu0 0.0
    %109 = vmatpush1.xpose.msra.mxu0 0.0
    %110 = vmatprep.subr.mxu0 0.0
    %111 = vmatpush1.xpose.msra.mxu0 0.0
    %112 = vmatprep.subr.mxu0 0.0
    %113 = vmatpush1.xpose.msra.mxu0 0.0
    %114 = vmatprep.subr.mxu0 0.0
    %115 = vmatpush1.xpose.msra.mxu0 0.0
    %116 = vmatprep.subr.mxu0 0.0
    %117 = vmatpush1.xpose.msra.mxu0 0.0
    %118 = vmatprep.subr.mxu0 0.0
    %119 = vmatpush1.xpose.msra.mxu0 0.0
    %120 = vmatprep.subr.mxu0 0.0
    %121 = vmatpush1.xpose.msra.mxu0 0.0
    %122 = vmatprep.subr.mxu0 0.0
    %123 = vmatpush1.xpose.msra.mxu0 0.0
    %124 = vmatprep.mubr.f32.mxu0 %v44
    %125 = vmatmul.mubr.f32.gmra.mrb[0].mxu0 %v43
    %v126 = vpop.f32.mrb[0].mxu0
    %v127 = vadd.f32 0.0, %v126
    %v128 = vpop.f32.mrb[0].mxu0
    %129 = vdwg.mxu0
    %130 = vmatprep.subr.mxu0 %v46
    %131 = vmatpush1.xpose.msra.mxu0 %v45
    %132 = vmatprep.subr.mxu0 0.0
    %133 = vmatpush1.xpose.msra.mxu0 0.0
    %134 = vmatprep.subr.mxu0 0.0
    %135 = vmatpush1.xpose.msra.mxu0 0.0
    %136 = vmatprep.subr.mxu0 0.0
    %137 = vmatpush1.xpose.msra.mxu0 0.0
    %138 = vmatprep.subr.mxu0 0.0
    %139 = vmatpush1.xpose.msra.mxu0 0.0
    %140 = vmatprep.subr.mxu0 0.0
    %141 = vmatpush1.xpose.msra.mxu0 0.0
    %142 = vmatprep.subr.mxu0 0.0
    %143 = vmatpush1.xpose.msra.mxu0 0.0
    %144 = vmatprep.subr.mxu0 0.0
    %145 = vmatpush1.xpose.msra.mxu0 0.0
    %146 = vmatprep.subr.mxu0 0.0
    %147 = vmatpush1.xpose.msra.mxu0 0.0
    %148 = vmatprep.subr.mxu0 0.0
    %149 = vmatpush1.xpose.msra.mxu0 0.0
    %150 = vmatprep.subr.mxu0 0.0
    %151 = vmatpush1.xpose.msra.mxu0 0.0
    %152 = vmatprep.subr.mxu0 0.0
    %153 = vmatpush1.xpose.msra.mxu0 0.0
    %154 = vmatprep.subr.mxu0 0.0
    %155 = vmatpush1.xpose.msra.mxu0 0.0
    %156 = vmatprep.subr.mxu0 0.0
    %157 = vmatpush1.xpose.msra.mxu0 0.0
    %158 = vmatprep.subr.mxu0 0.0
    %159 = vmatpush1.xpose.msra.mxu0 0.0
    %160 = vmatprep.subr.mxu0 0.0
    %161 = vmatpush1.xpose.msra.mxu0 0.0
    %162 = vmatprep.subr.mxu0 0.0
    %163 = vmatpush1.xpose.msra.mxu0 0.0
    %164 = vmatprep.subr.mxu0 0.0
    %165 = vmatpush1.xpose.msra.mxu0 0.0
    %166 = vmatprep.subr.mxu0 0.0
    %167 = vmatpush1.xpose.msra.mxu0 0.0
    %168 = vmatprep.subr.mxu0 0.0
    %169 = vmatpush1.xpose.msra.mxu0 0.0
    %170 = vmatprep.subr.mxu0 0.0
    %171 = vmatpush1.xpose.msra.mxu0 0.0
    %172 = vmatprep.subr.mxu0 0.0
    %173 = vmatpush1.xpose.msra.mxu0 0.0
    %174 = vmatprep.subr.mxu0 0.0
    %175 = vmatpush1.xpose.msra.mxu0 0.0
    %176 = vmatprep.subr.mxu0 0.0
    %177 = vmatpush1.xpose.msra.mxu0 0.0
    %178 = vmatprep.subr.mxu0 0.0
    %179 = vmatpush1.xpose.msra.mxu0 0.0
    %180 = vmatprep.subr.mxu0 0.0
    %181 = vmatpush1.xpose.msra.mxu0 0.0
    %182 = vmatprep.subr.mxu0 0.0
    %183 = vmatpush1.xpose.msra.mxu0 0.0
    %184 = vmatprep.subr.mxu0 0.0
    %185 = vmatpush1.xpose.msra.mxu0 0.0
    %186 = vmatprep.subr.mxu0 0.0
    %187 = vmatpush1.xpose.msra.mxu0 0.0
    %188 = vmatprep.subr.mxu0 0.0
    %189 = vmatpush1.xpose.msra.mxu0 0.0
    %190 = vmatprep.subr.mxu0 0.0
    %191 = vmatpush1.xpose.msra.mxu0 0.0
    %192 = vmatprep.subr.mxu0 0.0
    %193 = vmatpush1.xpose.msra.mxu0 0.0
    %194 = vmatprep.mubr.f32.mxu0 %v46
    %195 = vmatmul.mubr.f32.gmra.mrb[0].mxu0 %v45
    %v196 = vpop.f32.mrb[0].mxu0
    %v197 = vadd.f32 %v127, %v196
    %v198 = vpop.f32.mrb[0].mxu0
    %199 = vdwg.mxu0
    %200 = vmatprep.subr.mxu0 %v48
    %201 = vmatpush1.xpose.msra.mxu0 %v47
    %202 = vmatprep.subr.mxu0 0.0
    %203 = vmatpush1.xpose.msra.mxu0 0.0
    %204 = vmatprep.subr.mxu0 0.0
    %205 = vmatpush1.xpose.msra.mxu0 0.0
    %206 = vmatprep.subr.mxu0 0.0
    %207 = vmatpush1.xpose.msra.mxu0 0.0
    %208 = vmatprep.subr.mxu0 0.0
    %209 = vmatpush1.xpose.msra.mxu0 0.0
    %210 = vmatprep.subr.mxu0 0.0
    %211 = vmatpush1.xpose.msra.mxu0 0.0
    %212 = vmatprep.subr.mxu0 0.0
    %213 = vmatpush1.xpose.msra.mxu0 0.0
    %214 = vmatprep.subr.mxu0 0.0
    %215 = vmatpush1.xpose.msra.mxu0 0.0
    %216 = vmatprep.subr.mxu0 0.0
    %217 = vmatpush1.xpose.msra.mxu0 0.0
    %218 = vmatprep.subr.mxu0 0.0
    %219 = vmatpush1.xpose.msra.mxu0 0.0
    %220 = vmatprep.subr.mxu0 0.0
    %221 = vmatpush1.xpose.msra.mxu0 0.0
    %222 = vmatprep.subr.mxu0 0.0
    %223 = vmatpush1.xpose.msra.mxu0 0.0
    %224 = vmatprep.subr.mxu0 0.0
    %225 = vmatpush1.xpose.msra.mxu0 0.0
    %226 = vmatprep.subr.mxu0 0.0
    %227 = vmatpush1.xpose.msra.mxu0 0.0
    %228 = vmatprep.subr.mxu0 0.0
    %229 = vmatpush1.xpose.msra.mxu0 0.0
    %230 = vmatprep.subr.mxu0 0.0
    %231 = vmatpush1.xpose.msra.mxu0 0.0
    %232 = vmatprep.subr.mxu0 0.0
    %233 = vmatpush1.xpose.msra.mxu0 0.0
    %234 = vmatprep.subr.mxu0 0.0
    %235 = vmatpush1.xpose.msra.mxu0 0.0
    %236 = vmatprep.subr.mxu0 0.0
    %237 = vmatpush1.xpose.msra.mxu0 0.0
    %238 = vmatprep.subr.mxu0 0.0
    %239 = vmatpush1.xpose.msra.mxu0 0.0
    %240 = vmatprep.subr.mxu0 0.0
    %241 = vmatpush1.xpose.msra.mxu0 0.0
    %242 = vmatprep.subr.mxu0 0.0
    %243 = vmatpush1.xpose.msra.mxu0 0.0
    %244 = vmatprep.subr.mxu0 0.0
    %245 = vmatpush1.xpose.msra.mxu0 0.0
    %246 = vmatprep.subr.mxu0 0.0
    %247 = vmatpush1.xpose.msra.mxu0 0.0
    %248 = vmatprep.subr.mxu0 0.0
    %249 = vmatpush1.xpose.msra.mxu0 0.0
    %250 = vmatprep.subr.mxu0 0.0
    %251 = vmatpush1.xpose.msra.mxu0 0.0
    %252 = vmatprep.subr.mxu0 0.0
    %253 = vmatpush1.xpose.msra.mxu0 0.0
    %254 = vmatprep.subr.mxu0 0.0
    %255 = vmatpush1.xpose.msra.mxu0 0.0
    %256 = vmatprep.subr.mxu0 0.0
    %257 = vmatpush1.xpose.msra.mxu0 0.0
    %258 = vmatprep.subr.mxu0 0.0
    %259 = vmatpush1.xpose.msra.mxu0 0.0
    %260 = vmatprep.subr.mxu0 0.0
    %261 = vmatpush1.xpose.msra.mxu0 0.0
    %262 = vmatprep.subr.mxu0 0.0
    %263 = vmatpush1.xpose.msra.mxu0 0.0
    %264 = vmatprep.mubr.f32.mxu0 %v48
    %265 = vmatmul.mubr.f32.gmra.mrb[0].mxu0 %v47
    %v266 = vpop.f32.mrb[0].mxu0
    %v267 = vadd.f32 %v197, %v266
    %v268 = vpop.f32.mrb[0].mxu0
    %269 = vdwg.mxu0
    %270 = vmatprep.subr.mxu0 %v50
    %271 = vmatpush1.xpose.msra.mxu0 %v49
    %272 = vmatprep.subr.mxu0 0.0
    %273 = vmatpush1.xpose.msra.mxu0 0.0
    %274 = vmatprep.subr.mxu0 0.0
    %275 = vmatpush1.xpose.msra.mxu0 0.0
    %276 = vmatprep.subr.mxu0 0.0
    %277 = vmatpush1.xpose.msra.mxu0 0.0
    %278 = vmatprep.subr.mxu0 0.0
    %279 = vmatpush1.xpose.msra.mxu0 0.0
    %280 = vmatprep.subr.mxu0 0.0
    %281 = vmatpush1.xpose.msra.mxu0 0.0
    %282 = vmatprep.subr.mxu0 0.0
    %283 = vmatpush1.xpose.msra.mxu0 0.0
    %284 = vmatprep.subr.mxu0 0.0
    %285 = vmatpush1.xpose.msra.mxu0 0.0
    %286 = vmatprep.subr.mxu0 0.0
    %287 = vmatpush1.xpose.msra.mxu0 0.0
    %288 = vmatprep.subr.mxu0 0.0
    %289 = vmatpush1.xpose.msra.mxu0 0.0
    %290 = vmatprep.subr.mxu0 0.0
    %291 = vmatpush1.xpose.msra.mxu0 0.0
    %292 = vmatprep.subr.mxu0 0.0
    %293 = vmatpush1.xpose.msra.mxu0 0.0
    %294 = vmatprep.subr.mxu0 0.0
    %295 = vmatpush1.xpose.msra.mxu0 0.0
    %296 = vmatprep.subr.mxu0 0.0
    %297 = vmatpush1.xpose.msra.mxu0 0.0
    %298 = vmatprep.subr.mxu0 0.0
    %299 = vmatpush1.xpose.msra.mxu0 0.0
    %300 = vmatprep.subr.mxu0 0.0
    %301 = vmatpush1.xpose.msra.mxu0 0.0
    %302 = vmatprep.subr.mxu0 0.0
    %303 = vmatpush1.xpose.msra.mxu0 0.0
    %304 = vmatprep.subr.mxu0 0.0
    %305 = vmatpush1.xpose.msra.mxu0 0.0
    %306 = vmatprep.subr.mxu0 0.0
    %307 = vmatpush1.xpose.msra.mxu0 0.0
    %308 = vmatprep.subr.mxu0 0.0
    %309 = vmatpush1.xpose.msra.mxu0 0.0
    %310 = vmatprep.subr.mxu0 0.0
    %311 = vmatpush1.xpose.msra.mxu0 0.0
    %312 = vmatprep.subr.mxu0 0.0
    %313 = vmatpush1.xpose.msra.mxu0 0.0
    %314 = vmatprep.subr.mxu0 0.0
    %315 = vmatpush1.xpose.msra.mxu0 0.0
    %316 = vmatprep.subr.mxu0 0.0
    %317 = vmatpush1.xpose.msra.mxu0 0.0
    %318 = vmatprep.subr.mxu0 0.0
    %319 = vmatpush1.xpose.msra.mxu0 0.0
    %320 = vmatprep.subr.mxu0 0.0
    %321 = vmatpush1.xpose.msra.mxu0 0.0
    %322 = vmatprep.subr.mxu0 0.0
    %323 = vmatpush1.xpose.msra.mxu0 0.0
    %324 = vmatprep.subr.mxu0 0.0
    %325 = vmatpush1.xpose.msra.mxu0 0.0
    %326 = vmatprep.subr.mxu0 0.0
    %327 = vmatpush1.xpose.msra.mxu0 0.0
    %328 = vmatprep.subr.mxu0 0.0
    %329 = vmatpush1.xpose.msra.mxu0 0.0
    %330 = vmatprep.subr.mxu0 0.0
    %331 = vmatpush1.xpose.msra.mxu0 0.0
    %332 = vmatprep.subr.mxu0 0.0
    %333 = vmatpush1.xpose.msra.mxu0 0.0
    %334 = vmatprep.mubr.f32.mxu0 %v50
    %335 = vmatmul.mubr.f32.gmra.mrb[0].mxu0 %v49
    %v336 = vpop.f32.mrb[0].mxu0
    %v337 = vadd.f32 %v267, %v336
    %v338 = vpop.f32.mrb[0].mxu0
    %339 = vdwg.mxu0
    %v340 = vadd.f32 %v59, %v337
    %vm341 = vcmask 64512
    %342 = vst.msk [vmem:[#allocation2] sm:$0xff] %vm341, %v340
    %v343 = vld [vmem:[#allocation3] sm:$0xff]
    %344 = vmatprep.subr.mxu0 %v52
    %345 = vmatpush1.xpose.msra.mxu0 %v51
    %346 = vmatprep.subr.mxu0 0.0
    %347 = vmatpush1.xpose.msra.mxu0 0.0
    %348 = vmatprep.subr.mxu0 0.0
    %349 = vmatpush1.xpose.msra.mxu0 0.0
    %350 = vmatprep.subr.mxu0 0.0
    %351 = vmatpush1.xpose.msra.mxu0 0.0
    %352 = vmatprep.subr.mxu0 0.0
    %353 = vmatpush1.xpose.msra.mxu0 0.0
    %354 = vmatprep.subr.mxu0 0.0
    %355 = vmatpush1.xpose.msra.mxu0 0.0
    %356 = vmatprep.subr.mxu0 0.0
    %357 = vmatpush1.xpose.msra.mxu0 0.0
    %358 = vmatprep.subr.mxu0 0.0
    %359 = vmatpush1.xpose.msra.mxu0 0.0
    %360 = vmatprep.subr.mxu0 0.0
    %361 = vmatpush1.xpose.msra.mxu0 0.0
    %362 = vmatprep.subr.mxu0 0.0
    %363 = vmatpush1.xpose.msra.mxu0 0.0
    %364 = vmatprep.subr.mxu0 0.0
    %365 = vmatpush1.xpose.msra.mxu0 0.0
    %366 = vmatprep.subr.mxu0 0.0
    %367 = vmatpush1.xpose.msra.mxu0 0.0
    %368 = vmatprep.subr.mxu0 0.0
    %369 = vmatpush1.xpose.msra.mxu0 0.0
    %370 = vmatprep.subr.mxu0 0.0
    %371 = vmatpush1.xpose.msra.mxu0 0.0
    %372 = vmatprep.subr.mxu0 0.0
    %373 = vmatpush1.xpose.msra.mxu0 0.0
    %374 = vmatprep.subr.mxu0 0.0
    %375 = vmatpush1.xpose.msra.mxu0 0.0
    %376 = vmatprep.subr.mxu0 0.0
    %377 = vmatpush1.xpose.msra.mxu0 0.0
    %378 = vmatprep.subr.mxu0 0.0
    %379 = vmatpush1.xpose.msra.mxu0 0.0
    %380 = vmatprep.subr.mxu0 0.0
    %381 = vmatpush1.xpose.msra.mxu0 0.0
    %382 = vmatprep.subr.mxu0 0.0
    %383 = vmatpush1.xpose.msra.mxu0 0.0
    %384 = vmatprep.subr.mxu0 0.0
    %385 = vmatpush1.xpose.msra.mxu0 0.0
    %386 = vmatprep.subr.mxu0 0.0
    %387 = vmatpush1.xpose.msra.mxu0 0.0
    %388 = vmatprep.subr.mxu0 0.0
    %389 = vmatpush1.xpose.msra.mxu0 0.0
    %390 = vmatprep.subr.mxu0 0.0
    %391 = vmatpush1.xpose.msra.mxu0 0.0
    %392 = vmatprep.subr.mxu0 0.0
    %393 = vmatpush1.xpose.msra.mxu0 0.0
    %394 = vmatprep.subr.mxu0 0.0
    %395 = vmatpush1.xpose.msra.mxu0 0.0
    %396 = vmatprep.subr.mxu0 0.0
    %397 = vmatpush1.xpose.msra.mxu0 0.0
    %398 = vmatprep.subr.mxu0 0.0
    %399 = vmatpush1.xpose.msra.mxu0 0.0
    %400 = vmatprep.subr.mxu0 0.0
    %401 = vmatpush1.xpose.msra.mxu0 0.0
    %402 = vmatprep.subr.mxu0 0.0
    %403 = vmatpush1.xpose.msra.mxu0 0.0
    %404 = vmatprep.subr.mxu0 0.0
    %405 = vmatpush1.xpose.msra.mxu0 0.0
    %406 = vmatprep.subr.mxu0 0.0
    %407 = vmatpush1.xpose.msra.mxu0 0.0
    %408 = vmatprep.mubr.f32.mxu0 %v52
    %409 = vmatmul.mubr.f32.gmra.mrb[0].mxu0 %v51
    %v410 = vpop.f32.mrb[0].mxu0
    %v411 = vadd.f32 0.0, %v410
    %v412 = vpop.f32.mrb[0].mxu0
    %413 = vdwg.mxu0
    %414 = vmatprep.subr.mxu0 %v54
    %415 = vmatpush1.xpose.msra.mxu0 %v53
    %416 = vmatprep.subr.mxu0 0.0
    %417 = vmatpush1.xpose.msra.mxu0 0.0
    %418 = vmatprep.subr.mxu0 0.0
    %419 = vmatpush1.xpose.msra.mxu0 0.0
    %420 = vmatprep.subr.mxu0 0.0
    %421 = vmatpush1.xpose.msra.mxu0 0.0
    %422 = vmatprep.subr.mxu0 0.0
    %423 = vmatpush1.xpose.msra.mxu0 0.0
    %424 = vmatprep.subr.mxu0 0.0
    %425 = vmatpush1.xpose.msra.mxu0 0.0
    %426 = vmatprep.subr.mxu0 0.0
    %427 = vmatpush1.xpose.msra.mxu0 0.0
    %428 = vmatprep.subr.mxu0 0.0
    %429 = vmatpush1.xpose.msra.mxu0 0.0
    %430 = vmatprep.subr.mxu0 0.0
    %431 = vmatpush1.xpose.msra.mxu0 0.0
    %432 = vmatprep.subr.mxu0 0.0
    %433 = vmatpush1.xpose.msra.mxu0 0.0
    %434 = vmatprep.subr.mxu0 0.0
    %435 = vmatpush1.xpose.msra.mxu0 0.0
    %436 = vmatprep.subr.mxu0 0.0
    %437 = vmatpush1.xpose.msra.mxu0 0.0
    %438 = vmatprep.subr.mxu0 0.0
    %439 = vmatpush1.xpose.msra.mxu0 0.0
    %440 = vmatprep.subr.mxu0 0.0
    %441 = vmatpush1.xpose.msra.mxu0 0.0
    %442 = vmatprep.subr.mxu0 0.0
    %443 = vmatpush1.xpose.msra.mxu0 0.0
    %444 = vmatprep.subr.mxu0 0.0
    %445 = vmatpush1.xpose.msra.mxu0 0.0
    %446 = vmatprep.subr.mxu0 0.0
    %447 = vmatpush1.xpose.msra.mxu0 0.0
    %448 = vmatprep.subr.mxu0 0.0
    %449 = vmatpush1.xpose.msra.mxu0 0.0
    %450 = vmatprep.subr.mxu0 0.0
    %451 = vmatpush1.xpose.msra.mxu0 0.0
    %452 = vmatprep.subr.mxu0 0.0
    %453 = vmatpush1.xpose.msra.mxu0 0.0
    %454 = vmatprep.subr.mxu0 0.0
    %455 = vmatpush1.xpose.msra.mxu0 0.0
    %456 = vmatprep.subr.mxu0 0.0
    %457 = vmatpush1.xpose.msra.mxu0 0.0
    %458 = vmatprep.subr.mxu0 0.0
    %459 = vmatpush1.xpose.msra.mxu0 0.0
    %460 = vmatprep.subr.mxu0 0.0
    %461 = vmatpush1.xpose.msra.mxu0 0.0
    %462 = vmatprep.subr.mxu0 0.0
    %463 = vmatpush1.xpose.msra.mxu0 0.0
    %464 = vmatprep.subr.mxu0 0.0
    %465 = vmatpush1.xpose.msra.mxu0 0.0
    %466 = vmatprep.subr.mxu0 0.0
    %467 = vmatpush1.xpose.msra.mxu0 0.0
    %468 = vmatprep.subr.mxu0 0.0
    %469 = vmatpush1.xpose.msra.mxu0 0.0
    %470 = vmatprep.subr.mxu0 0.0
    %471 = vmatpush1.xpose.msra.mxu0 0.0
    %472 = vmatprep.subr.mxu0 0.0
    %473 = vmatpush1.xpose.msra.mxu0 0.0
    %474 = vmatprep.subr.mxu0 0.0
    %475 = vmatpush1.xpose.msra.mxu0 0.0
    %476 = vmatprep.subr.mxu0 0.0
    %477 = vmatpush1.xpose.msra.mxu0 0.0
    %478 = vmatprep.mubr.f32.mxu0 %v54
    %479 = vmatmul.mubr.f32.gmra.mrb[0].mxu0 %v53
    %v480 = vpop.f32.mrb[0].mxu0
    %v481 = vadd.f32 %v411, %v480
    %v482 = vpop.f32.mrb[0].mxu0
    %483 = vdwg.mxu0
    %484 = vmatprep.subr.mxu0 %v56
    %485 = vmatpush1.xpose.msra.mxu0 %v55
    %486 = vmatprep.subr.mxu0 0.0
    %487 = vmatpush1.xpose.msra.mxu0 0.0
    %488 = vmatprep.subr.mxu0 0.0
    %489 = vmatpush1.xpose.msra.mxu0 0.0
    %490 = vmatprep.subr.mxu0 0.0
    %491 = vmatpush1.xpose.msra.mxu0 0.0
    %492 = vmatprep.subr.mxu0 0.0
    %493 = vmatpush1.xpose.msra.mxu0 0.0
    %494 = vmatprep.subr.mxu0 0.0
    %495 = vmatpush1.xpose.msra.mxu0 0.0
    %496 = vmatprep.subr.mxu0 0.0
    %497 = vmatpush1.xpose.msra.mxu0 0.0
    %498 = vmatprep.subr.mxu0 0.0
    %499 = vmatpush1.xpose.msra.mxu0 0.0
    %500 = vmatprep.subr.mxu0 0.0
    %501 = vmatpush1.xpose.msra.mxu0 0.0
    %502 = vmatprep.subr.mxu0 0.0
    %503 = vmatpush1.xpose.msra.mxu0 0.0
    %504 = vmatprep.subr.mxu0 0.0
    %505 = vmatpush1.xpose.msra.mxu0 0.0
    %506 = vmatprep.subr.mxu0 0.0
    %507 = vmatpush1.xpose.msra.mxu0 0.0
    %508 = vmatprep.subr.mxu0 0.0
    %509 = vmatpush1.xpose.msra.mxu0 0.0
    %510 = vmatprep.subr.mxu0 0.0
    %511 = vmatpush1.xpose.msra.mxu0 0.0
    %512 = vmatprep.subr.mxu0 0.0
    %513 = vmatpush1.xpose.msra.mxu0 0.0
    %514 = vmatprep.subr.mxu0 0.0
    %515 = vmatpush1.xpose.msra.mxu0 0.0
    %516 = vmatprep.subr.mxu0 0.0
    %517 = vmatpush1.xpose.msra.mxu0 0.0
    %518 = vmatprep.subr.mxu0 0.0
    %519 = vmatpush1.xpose.msra.mxu0 0.0
    %520 = vmatprep.subr.mxu0 0.0
    %521 = vmatpush1.xpose.msra.mxu0 0.0
    %522 = vmatprep.subr.mxu0 0.0
    %523 = vmatpush1.xpose.msra.mxu0 0.0
    %524 = vmatprep.subr.mxu0 0.0
    %525 = vmatpush1.xpose.msra.mxu0 0.0
    %526 = vmatprep.subr.mxu0 0.0
    %527 = vmatpush1.xpose.msra.mxu0 0.0
    %528 = vmatprep.subr.mxu0 0.0
    %529 = vmatpush1.xpose.msra.mxu0 0.0
    %530 = vmatprep.subr.mxu0 0.0
    %531 = vmatpush1.xpose.msra.mxu0 0.0
    %532 = vmatprep.subr.mxu0 0.0
    %533 = vmatpush1.xpose.msra.mxu0 0.0
    %534 = vmatprep.subr.mxu0 0.0
    %535 = vmatpush1.xpose.msra.mxu0 0.0
    %536 = vmatprep.subr.mxu0 0.0
    %537 = vmatpush1.xpose.msra.mxu0 0.0
    %538 = vmatprep.subr.mxu0 0.0
    %539 = vmatpush1.xpose.msra.mxu0 0.0
    %540 = vmatprep.subr.mxu0 0.0
    %541 = vmatpush1.xpose.msra.mxu0 0.0
    %542 = vmatprep.subr.mxu0 0.0
    %543 = vmatpush1.xpose.msra.mxu0 0.0
    %544 = vmatprep.subr.mxu0 0.0
    %545 = vmatpush1.xpose.msra.mxu0 0.0
    %546 = vmatprep.subr.mxu0 0.0
    %547 = vmatpush1.xpose.msra.mxu0 0.0
    %548 = vmatprep.mubr.f32.mxu0 %v56
    %549 = vmatmul.mubr.f32.gmra.mrb[0].mxu0 %v55
    %v550 = vpop.f32.mrb[0].mxu0
    %v551 = vadd.f32 %v481, %v550
    %v552 = vpop.f32.mrb[0].mxu0
    %553 = vdwg.mxu0
    %554 = vmatprep.subr.mxu0 %v58
    %555 = vmatpush1.xpose.msra.mxu0 %v57
    %556 = vmatprep.subr.mxu0 0.0
    %557 = vmatpush1.xpose.msra.mxu0 0.0
    %558 = vmatprep.subr.mxu0 0.0
    %559 = vmatpush1.xpose.msra.mxu0 0.0
    %560 = vmatprep.subr.mxu0 0.0
    %561 = vmatpush1.xpose.msra.mxu0 0.0
    %562 = vmatprep.subr.mxu0 0.0
    %563 = vmatpush1.xpose.msra.mxu0 0.0
    %564 = vmatprep.subr.mxu0 0.0
    %565 = vmatpush1.xpose.msra.mxu0 0.0
    %566 = vmatprep.subr.mxu0 0.0
    %567 = vmatpush1.xpose.msra.mxu0 0.0
    %568 = vmatprep.subr.mxu0 0.0
    %569 = vmatpush1.xpose.msra.mxu0 0.0
    %570 = vmatprep.subr.mxu0 0.0
    %571 = vmatpush1.xpose.msra.mxu0 0.0
    %572 = vmatprep.subr.mxu0 0.0
    %573 = vmatpush1.xpose.msra.mxu0 0.0
    %574 = vmatprep.subr.mxu0 0.0
    %575 = vmatpush1.xpose.msra.mxu0 0.0
    %576 = vmatprep.subr.mxu0 0.0
    %577 = vmatpush1.xpose.msra.mxu0 0.0
    %578 = vmatprep.subr.mxu0 0.0
    %579 = vmatpush1.xpose.msra.mxu0 0.0
    %580 = vmatprep.subr.mxu0 0.0
    %581 = vmatpush1.xpose.msra.mxu0 0.0
    %582 = vmatprep.subr.mxu0 0.0
    %583 = vmatpush1.xpose.msra.mxu0 0.0
    %584 = vmatprep.subr.mxu0 0.0
    %585 = vmatpush1.xpose.msra.mxu0 0.0
    %586 = vmatprep.subr.mxu0 0.0
    %587 = vmatpush1.xpose.msra.mxu0 0.0
    %588 = vmatprep.subr.mxu0 0.0
    %589 = vmatpush1.xpose.msra.mxu0 0.0
    %590 = vmatprep.subr.mxu0 0.0
    %591 = vmatpush1.xpose.msra.mxu0 0.0
    %592 = vmatprep.subr.mxu0 0.0
    %593 = vmatpush1.xpose.msra.mxu0 0.0
    %594 = vmatprep.subr.mxu0 0.0
    %595 = vmatpush1.xpose.msra.mxu0 0.0
    %596 = vmatprep.subr.mxu0 0.0
    %597 = vmatpush1.xpose.msra.mxu0 0.0
    %598 = vmatprep.subr.mxu0 0.0
    %599 = vmatpush1.xpose.msra.mxu0 0.0
    %600 = vmatprep.subr.mxu0 0.0
    %601 = vmatpush1.xpose.msra.mxu0 0.0
    %602 = vmatprep.subr.mxu0 0.0
    %603 = vmatpush1.xpose.msra.mxu0 0.0
    %604 = vmatprep.subr.mxu0 0.0
    %605 = vmatpush1.xpose.msra.mxu0 0.0
    %606 = vmatprep.subr.mxu0 0.0
    %607 = vmatpush1.xpose.msra.mxu0 0.0
    %608 = vmatprep.subr.mxu0 0.0
    %609 = vmatpush1.xpose.msra.mxu0 0.0
    %610 = vmatprep.subr.mxu0 0.0
    %611 = vmatpush1.xpose.msra.mxu0 0.0
    %612 = vmatprep.subr.mxu0 0.0
    %613 = vmatpush1.xpose.msra.mxu0 0.0
    %614 = vmatprep.subr.mxu0 0.0
    %615 = vmatpush1.xpose.msra.mxu0 0.0
    %616 = vmatprep.subr.mxu0 0.0
    %617 = vmatpush1.xpose.msra.mxu0 0.0
    %618 = vmatprep.mubr.f32.mxu0 %v58
    %619 = vmatmul.mubr.f32.gmra.mrb[0].mxu0 %v57
    %v620 = vpop.f32.mrb[0].mxu0
    %v621 = vadd.f32 %v551, %v620
    %v622 = vpop.f32.mrb[0].mxu0
    %623 = vdwg.mxu0
    %v624 = vadd.f32 %v343, %v621
    %625 = vst.msk [vmem:[#allocation3] sm:$0xff] %vm341, %v624
    // Predicated region
    $region22: #{tpu_custom_call.1} parent=1 // pred_check
      %p626 = pneg %p36
    $region23: #{tpu_custom_call.1} parent=1 // pred_check_branch
      %628 = sbr.rel (%p626) target = $region25
    $region24: #{tpu_custom_call.1} parent=1 // pred_region
      %v629 = vlaneseq
      %v630 = vshrl.u32 %v629, 7
      %v631 = vlaneseq
      %v632 = vand.u32 %v631, 127
      %vm633 = vcmp.eq.s32.totalorder %v630, %v632
      %v634 = vld [vmem:[#allocation2] sm:$0xff]
      %v635 = vsel %vm633, %v634, 0.0
      %v636 = vsel %vm341, %v635, 0.0
      %637 = vadd.xlane.f32.xlu0 %v636
      %v638 = vpop.xlane.xlu0 %637
      %v639 = vrot.slane %v636, 4
      %v640 = vadd.f32 %v636, %v639
      %v641 = vrot.slane %v640, 2
      %v642 = vadd.f32 %v640, %v641
      %v643 = vrot.slane %v642, 1
      %v644 = vadd.f32 %v642, %v643
      %v645 = vrsqrt.pop %v638
      %v646 = vmul.f32 %v638, %v645
      %vm647 = vcmp.eq.f32.partialorder %v638, inf
      %v648 = vsel %vm647, %v638, %v646
      %vm649 = vcmp.eq.f32.partialorder %v638, 0.0
      %v650 = vand.u32 %v638, 2147483648
      %v651 = vsel %vm649, %v650, %v648
      %v652 = vmax.f32 %v651, 1e-12
      %v653 = vrcp.pop %v652
      %v654 = vmul.f32 1.0, %v653
      %v655 = vrsqrt.pop %v644
      %v656 = vmul.f32 %v644, %v655
      %vm657 = vcmp.eq.f32.partialorder %v644, inf
      %v658 = vsel %vm657, %v644, %v656
      %vm659 = vcmp.eq.f32.partialorder %v644, 0.0
      %v660 = vand.u32 %v644, 2147483648
      %v661 = vsel %vm659, %v660, %v658
      %v662 = vmax.f32 %v661, 1e-12
      %v663 = vrcp.pop %v662
      %v664 = vmul.f32 1.0, %v663
      %v665 = vmul.f32 %v634, %v654
      %v666 = vmul.f32 %v665, %v664
      %v667 = vmul.f32 %v638, %v654
      %v668 = vmul.f32 %v667, %v654
      %v669 = vmul.f32 %v644, %v664
      %v670 = vmul.f32 %v669, %v664
      %v671 = vadd.f32 %v668, %v670
      %v672 = vmul.f32 %v666, 2.0
      %v673 = vsub.f32 %v671, %v672
      %v674 = vmax.f32 %v673, 1e-12
      %v675 = vrsqrt.pop %v674
      %v676 = vmul.f32 %v674, %v675
      %vm677 = vcmp.eq.f32.partialorder %v674, inf
      %v678 = vsel %vm677, %v674, %v676
      %vm679 = vcmp.eq.f32.partialorder %v674, 0.0
      %v680 = vand.u32 %v674, 2147483648
      %v681 = vsel %vm679, %v680, %v678
      %v682 = vsel %vm633, 0.0, %v681
      %vm683 = vcmp.gt.f32.partialorder %v682, 0.0
      %v684 = vsel %vm683, 1, 0
      %v685 = vcvt.s32.f32 %v684
      %v686 = vsel %vm341, %v685, 0.0
      %687 = vadd.xlane.f32.xlu0 %v686
      %v688 = vpop.xlane.xlu0 %687
      %v689 = vrot.slane %v688, 4
      %v690 = vadd.f32 %v688, %v689
      %v691 = vrot.slane %v690, 2
      %v692 = vadd.f32 %v690, %v691
      %v693 = vrot.slane %v692, 1
      %v694 = vadd.f32 %v692, %v693
      %s695 = vtos %v694
      %v696 = vsel %vm341, %v682, 0.0
      %697 = vadd.xlane.f32.xlu0 %v696
      %v698 = vpop.xlane.xlu0 %697
      %v699 = vrot.slane %v698, 4
      %v700 = vadd.f32 %v698, %v699
      %v701 = vrot.slane %v700, 2
      %v702 = vadd.f32 %v700, %v701
      %v703 = vrot.slane %v702, 1
      %v704 = vadd.f32 %v702, %v703
      %s705 = vtos %v704
      %v706 = vstv %s695
      %v707 = vrcp.pop %v706
      %s708 = vtos %v707
      %s709 = smul.f32 %s705, %s708
      %v710 = vstv %s709
      %v711 = vrcp.pop %v710
      %v712 = vmul.f32 %v682, %v711
      %v713 = vld [vmem:[#allocation3] sm:$0xff]
      %v714 = vsel %vm633, %v713, 0.0
      %v715 = vsel %vm341, %v714, 0.0
      %716 = vadd.xlane.f32.xlu0 %v715
      %v717 = vpop.xlane.xlu0 %716
      %v718 = vrot.slane %v715, 4
      %v719 = vadd.f32 %v715, %v718
      %v720 = vrot.slane %v719, 2
      %v721 = vadd.f32 %v719, %v720
      %v722 = vrot.slane %v721, 1
      %v723 = vadd.f32 %v721, %v722
      %v724 = vrsqrt.pop %v717
      %v725 = vmul.f32 %v717, %v724
      %vm726 = vcmp.eq.f32.partialorder %v717, inf
      %v727 = vsel %vm726, %v717, %v725
      %vm728 = vcmp.eq.f32.partialorder %v717, 0.0
      %v729 = vand.u32 %v717, 2147483648
      %v730 = vsel %vm728, %v729, %v727
      %v731 = vmax.f32 %v730, 1e-12
      %v732 = vrcp.pop %v731
      %v733 = vmul.f32 1.0, %v732
      %v734 = vrsqrt.pop %v723
      %v735 = vmul.f32 %v723, %v734
      %vm736 = vcmp.eq.f32.partialorder %v723, inf
      %v737 = vsel %vm736, %v723, %v735
      %vm738 = vcmp.eq.f32.partialorder %v723, 0.0
      %v739 = vand.u32 %v723, 2147483648
      %v740 = vsel %vm738, %v739, %v737
      %v741 = vmax.f32 %v740, 1e-12
      %v742 = vrcp.pop %v741
      %v743 = vmul.f32 1.0, %v742
      %v744 = vmul.f32 %v713, %v733
      %v745 = vmul.f32 %v744, %v743
      %v746 = vmul.f32 %v717, %v733
      %v747 = vmul.f32 %v746, %v733
      %v748 = vmul.f32 %v723, %v743
      %v749 = vmul.f32 %v748, %v743
      %v750 = vadd.f32 %v747, %v749
      %v751 = vmul.f32 %v745, 2.0
      %v752 = vsub.f32 %v750, %v751
      %v753 = vmax.f32 %v752, 1e-12
      %v754 = vrsqrt.pop %v753
      %v755 = vmul.f32 %v753, %v754
      %vm756 = vcmp.eq.f32.partialorder %v753, inf
      %v757 = vsel %vm756, %v753, %v755
      %vm758 = vcmp.eq.f32.partialorder %v753, 0.0
      %v759 = vand.u32 %v753, 2147483648
      %v760 = vsel %vm758, %v759, %v757
      %v761 = vsel %vm633, 0.0, %v760
      %vm762 = vcmp.gt.f32.partialorder %v761, 0.0
      %v763 = vsel %vm762, 1, 0
      %v764 = vcvt.s32.f32 %v763
      %v765 = vsel %vm341, %v764, 0.0
      %766 = vadd.xlane.f32.xlu0 %v765
      %v767 = vpop.xlane.xlu0 %766
      %v768 = vrot.slane %v767, 4
      %v769 = vadd.f32 %v767, %v768
      %v770 = vrot.slane %v769, 2
      %v771 = vadd.f32 %v769, %v770
      %v772 = vrot.slane %v771, 1
      %v773 = vadd.f32 %v771, %v772
      %s774 = vtos %v773
      %v775 = vsel %vm341, %v761, 0.0
      %776 = vadd.xlane.f32.xlu0 %v775
      %v777 = vpop.xlane.xlu0 %776
      %v778 = vrot.slane %v777, 4
      %v779 = vadd.f32 %v777, %v778
      %v780 = vrot.slane %v779, 2
      %v781 = vadd.f32 %v779, %v780
      %v782 = vrot.slane %v781, 1
      %v783 = vadd.f32 %v781, %v782
      %s784 = vtos %v783
      %v785 = vstv %s774
      %v786 = vrcp.pop %v785
      %s787 = vtos %v786
      %s788 = smul.f32 %s784, %s787
      %v789 = vstv %s788
      %v790 = vrcp.pop %v789
      %v791 = vmul.f32 %v761, %v790
      %v792 = vsub.f32 %v712, %v791
      %v793 = vand.u32 2147483647, %v792
      %vm794 = vcmp.lt.f32.partialorder %v793, 1.0
      %v795 = vmul.f32 %v792, 0.5
      %v796 = vmul.f32 %v795, %v792
      %v797 = vsub.f32 %v793, 0.5
      %v798 = vsel %vm794, %v796, %v797
      %v799 = vsel %vm341, %v798, 0.0
      %800 = vadd.xlane.f32.xlu0 %v799
      %v801 = vpop.xlane.xlu0 %800
      %v802 = vrot.slane %v801, 4
      %v803 = vadd.f32 %v801, %v802
      %v804 = vrot.slane %v803, 2
      %v805 = vadd.f32 %v803, %v804
      %v806 = vrot.slane %v805, 1
      %v807 = vadd.f32 %v805, %v806
      %s808 = vtos %v807
      %v809 = vrcp.pop 64.0
      %s810 = vtos %v809
      %s811 = smul.f32 %s808, %s810
      %s812 = smul.f32 %s811, 25.0
      %s813 = scalar_lea.smem [#allocation9], 0
      %814 = sst [smem:[%s813]] %s812
    $region25: #{tpu_custom_call.1} parent=1 // pred_fallthru
      _
    // Predicated region
    $region26: #{tpu_custom_call.1} parent=1 // pred_check
      _
    $region27: #{tpu_custom_call.1} parent=1 // pred_check_branch
      %816 = sbr.rel (0) target = $region29
    $region28: #{tpu_custom_call.1} parent=1 // pred_region
      %s818 = ssub.s32 16, 16
      %819 = vsyncadd [#allocation6], %s818
      %822 = dma.smem_to_hbm [#allocation9], 16, %s2, [#allocation6]
    $region29: #{tpu_custom_call.1} parent=1 // pred_fallthru
      _
    // Predicated region
    $region30: #{tpu_custom_call.1} parent=1 // pred_check
      _
    $region31: #{tpu_custom_call.1} parent=1 // pred_check_branch
      %824 = sbr.rel (0) target = $region33
    $region32: #{tpu_custom_call.1} parent=1 // pred_region
      %825 = dma.done [#allocation6], 16
    $region33: #{tpu_custom_call.1} parent=1 // pred_fallthru
      _
    %826 = sfence
    %827 = vsyncpa [#allocation5], 1
    %828 = vsyncpa [#allocation8], 1
    %829 = vsyncpa [#allocation6], 1

</llo_original>
